<compile_context>
chip_gen: v7x
topology: tpu7x:2x2x1
jax: 0.10.0
libtpu: 0.0.40
codegen_flags: <defaults>
</compile_context>

<pallas_src>
import functools

import jax
import jax.numpy as jnp
from jax.experimental import pallas as pl
from jax.experimental.pallas import tpu as pltpu


# ---------------------------------------------------------------------------
# Pallas kernel: one LightGCN layer   E_out = scale * (E + A_tilda @ E)
# ---------------------------------------------------------------------------
def _lgc_layer_kernel(a_ref, e_dot_ref, e_res_ref, o_ref, *,
                      tk, scale, resident, a_dtype):
    """Grid = (Np//tm, Np//tk); axis 1 (k) is the contraction axis.

    a_ref     : (tm, tk)  A_tilda tile (bf16 -- the only big HBM stream)
    e_dot_ref : resident mode -> (Np, Dp) full E, VMEM-resident (fetched once
                per core); streamed fallback -> (tk, Dp) column block of E
    e_res_ref : (tm, Dp)  E row block matching this output tile (residual)
    o_ref     : (tm, Dp)  f32 output tile, doubles as the accumulator
                (same block index for every k -> stays in VMEM across k)
    """
    k = pl.program_id(1)

    # Residual fold:  E + A @ E  ==  init the accumulator with the E row block
    # (free VMEM copy; keeps the residual exact f32, no "A + I" needed).
    @pl.when(k == 0)
    def _():
        o_ref[...] = e_res_ref[...]

    if resident:
        col = pl.multiple_of(k * tk, tk)
        e_blk = e_dot_ref[pl.ds(col, tk), :]
    else:
        e_blk = e_dot_ref[...]

    # bf16 x bf16 -> f32 accumulate on the MXU. The per-step cast of the E
    # slice is a small VPU op fully hidden under the HBM-bound A stream.
    o_ref[...] += jnp.dot(a_ref[...], e_blk.astype(a_dtype),
                          preferred_element_type=jnp.float32)

    # Fuse the final 1/(n_layers+1) into the last layer's epilogue.
    if scale != 1.0:
        @pl.when(k == pl.num_programs(1) - 1)
        def _():
            o_ref[...] = o_ref[...] * scale


def _vmem_capacity_bytes():
    """Generation-aware VMEM capacity (v5e/v6e: 128 MiB, v7x: 64 MiB/TC)."""
    try:
        cap = int(pltpu.get_tpu_info().vmem_capacity_bytes)
        if cap > 0:
            return cap
    except Exception:
        pass
    return 64 << 20  # conservative fallback: v7x per-TensorCore VMEM


def lightgcn_layer(A_p, E, *, tm, tk, scale=1.0):
    """Computes scale * (E + A_p @ E) with a tiled Pallas kernel.

    A_p: (Np, Np) padded bf16 adjacency, E: (Np, Dp) f32 embeddings.
    """
    Np, Dp = E.shape
    assert A_p.shape == (Np, Np)
    assert Np % tm == 0 and Np % tk == 0 and Dp % 128 == 0

    a_bytes = A_p.dtype.itemsize
    # Leave ~12% headroom on top of physical capacity for Mosaic's internal
    # scratch (~56 MiB usable on v7x, ~112 MiB on v5e/v6e).
    budget = max(32 << 20, (_vmem_capacity_bytes() * 7) // 8)

    # Preferred: whole E resident in VMEM so A is the only HBM stream.
    resident_est = (2 * Np * Dp * 4          # full E (pipeline-buffered)
                    + 2 * tm * tk * a_bytes  # streamed A tile (double-buffered)
                    + 2 * tm * Dp * 4        # residual E row block
                    + 2 * tm * Dp * 4)       # output/accumulator tile
    resident = resident_est + (2 << 20) <= budget
    if resident:
        e_dot_spec = pl.BlockSpec((Np, Dp), lambda i, k: (0, 0))
        est = resident_est
    else:
        # Fallback for graphs whose E does not fit VMEM: stream E column
        # blocks (extra E traffic, but always compiles instead of spilling).
        e_dot_spec = pl.BlockSpec((tk, Dp), lambda i, k: (k, 0))
        est = 2 * tk * Dp * 4 + 2 * tm * tk * a_bytes + 4 * tm * Dp * 4

    vmem_limit = int(max(32 << 20, min(est + (4 << 20), budget)))

    cost = pl.CostEstimate(
        flops=2 * Np * Np * Dp,
        bytes_accessed=Np * Np * a_bytes + 3 * Np * Dp * 4,
        transcendentals=0,
    )

    kernel = functools.partial(_lgc_layer_kernel, tk=tk, scale=float(scale),
                               resident=resident, a_dtype=A_p.dtype)

    return pl.pallas_call(
        kernel,
        out_shape=jax.ShapeDtypeStruct((Np, Dp), jnp.float32),
        grid_spec=pltpu.PrefetchScalarGridSpec(
            num_scalar_prefetch=0,
            grid=(Np // tm, Np // tk),
            in_specs=[
                pl.BlockSpec((tm, tk), lambda i, k: (i, k)),   # A tile (bf16 stream)
                e_dot_spec,                                    # E operand for the dot
                pl.BlockSpec((tm, Dp), lambda i, k: (i, 0)),   # E row block (residual)
            ],
            out_specs=pl.BlockSpec((tm, Dp), lambda i, k: (i, 0)),
        ),
        compiler_params=pltpu.CompilerParams(
            dimension_semantics=("parallel", "arbitrary"),
            vmem_limit_bytes=vmem_limit,
        ),
        cost_estimate=cost,
    )(A_p, E, E)


# ---------------------------------------------------------------------------
# Tiling / padding helpers
# ---------------------------------------------------------------------------
def _round_up(x, m):
    return ((x + m - 1) // m) * m


def _choose_tiles(N, *, tm_cap=512, tk_cap=2048):
    """Pick (tm, tk, Np) with tm | Np, tk | Np, both multiples of 128."""
    n128 = _round_up(N, 128)
    if n128 >= tk_cap:
        # Large graph: keep the contraction tile at the cap (fewer grid steps,
        # less accumulator RMW per A byte -- matters most on v5e's single
        # vector-store slot) and keep Np/tm >= 2 so the parallel row-band axis
        # splits across the two v7x TensorCores.
        tm = min(tm_cap, tk_cap // 2)
        Np = _round_up(N, tk_cap)
        tk = tk_cap
    else:
        tm = min(tm_cap, n128)
        if n128 >= 256:                 # leave >= 2 row-band blocks for v7x
            tm = min(tm, n128 // 2)
        tm = max(128, (tm // 128) * 128)
        Np = _round_up(N, tm)
        tk = Np                         # whole contraction in one grid step
    return tm, tk, Np


def prepare_graph(A_tilda, *, a_dtype=jnp.bfloat16, tm_cap=512, tk_cap=2048):
    """One-time, per-graph prep (hoisted out of the per-forward jit):
    choose tiles, zero-pad A_tilda to (Np, Np) and cast the stream to bf16."""
    N = A_tilda.shape[0]
    tm, tk, Np = _choose_tiles(N, tm_cap=tm_cap, tk_cap=tk_cap)
    A_p = jnp.zeros((Np, Np), a_dtype).at[:N, :N].set(A_tilda.astype(a_dtype))
    return A_p, tm, tk


# ---------------------------------------------------------------------------
# Model glue (plain JAX, mirrors the PyTorch module)
# ---------------------------------------------------------------------------
def build_a_tilda(user_idx, item_idx, n_users, n_items, r):
    """Dense replica of LightGCNModel._get_A_tilda (r-AdjNorm)."""
    N = n_users + n_items
    R = jnp.zeros((n_users, n_items), jnp.float32)
    # duplicated (u, i) pairs: torch sparse COO sums duplicates -> use .add
    R = R.at[user_idx, item_idx].add(1.0)

    adj = jnp.zeros((N, N), jnp.float32)
    adj = adj.at[:n_users, n_users:].set(R)
    adj = adj.at[n_users:, :n_users].set(R.T)

    rowsum = adj.sum(axis=1)
    d_inv_left = jnp.power(1e-9 + rowsum, -r)
    left_inf = jnp.isinf(d_inv_left)
    d_inv_left = jnp.where(left_inf, 0.0, d_inv_left)
    d_inv_right = jnp.power(1e-9 + rowsum, -(1.0 - r))
    # NOTE: PyTorch code masks d_inv_right with isinf(d_inv_LEFT); replicate.
    d_inv_right = jnp.where(left_inf, 0.0, d_inv_right)

    # D_left @ adj @ D_right (diagonal scalings)
    return d_inv_left[:, None] * adj * d_inv_right[None, :]


def xavier_uniform(key, shape):
    fan_in, fan_out = shape[0], shape[1]
    limit = (6.0 / (fan_in + fan_out)) ** 0.5
    return jax.random.uniform(key, shape, jnp.float32, -limit, limit)


@functools.partial(jax.jit,
                   static_argnames=("n_users", "n_items", "n_layers", "tm", "tk"))
def lightgcn_forward(E0, A_p, users, pos_items, neg_items,
                     *, n_users, n_items, n_layers, tm, tk):
    """Replicates LightGCNModel.forward (A_p is the pre-padded bf16 graph)."""
    N, D = E0.shape
    Np = A_p.shape[0]
    Dp = _round_up(D, 128)

    # Pad E: emb_dim -> lane-dense 128 multiple; extra rows are zero so the
    # padded A rows/cols contribute nothing.
    E = jnp.zeros((Np, Dp), jnp.float32).at[:N, :D].set(E0)

    inv = 1.0 / (n_layers + 1)
    for layer in range(n_layers):
        scale = inv if layer == n_layers - 1 else 1.0
        E = lightgcn_layer(A_p, E, tm=tm, tk=tk, scale=scale)
    # n_layers == 0: inv == 1.0, E already correct.

    E = E[:N, :D]
    usr_all, itm_all = E[:n_users], E[n_users:]
    return (jnp.take(usr_all, users, axis=0),
            jnp.take(itm_all, pos_items, axis=0),
            jnp.take(itm_all, neg_items, axis=0))


# ---------------------------------------------------------------------------
# References (pure jnp) for correctness checks
# ---------------------------------------------------------------------------
def lightgcn_ref(E0, A_tilda, users, pos_items, neg_items,
                 n_users, n_layers, *, bf16_inputs):
    """bf16_inputs=False: exact f32 module semantics.
    bf16_inputs=True: same input rounding as the kernel (bf16 A and E operand,
    f32 accumulation) -- tight kernel-mechanics check."""
    A = A_tilda
    if bf16_inputs:
        A = A.astype(jnp.bfloat16).astype(jnp.float32)
    E = E0
    for _ in range(n_layers):
        Ein = E.astype(jnp.bfloat16).astype(jnp.float32) if bf16_inputs else E
        E = E + jnp.dot(A, Ein, precision=jax.lax.Precision.HIGHEST)
    E = E / (n_layers + 1)
    return (E[:n_users][users], E[n_users:][pos_items], E[n_users:][neg_items])


if __name__ == "__main__":
    # Small, (8,128)-friendly synthetic config
    n_users, n_items = 96, 160                 # N = 256
    emb_dim = 64
    n_layers = 3
    r = 0.5
    n_interactions = 512
    batch = 8

    key = jax.random.PRNGKey(0)
    k_e, k_u, k_i, k_bu, k_bp, k_bn = jax.random.split(key, 6)

    # Deterministic parameter init (matches nn.Embedding + xavier_uniform_)
    E0 = xavier_uniform(k_e, (n_users + n_items, emb_dim))

    # Synthetic interaction data (CONFIG['data'])
    user_idx = jax.random.randint(k_u, (n_interactions,), 0, n_users)
    item_idx = jax.random.randint(k_i, (n_interactions,), 0, n_items)
    A_tilda = build_a_tilda(user_idx, item_idx, n_users, n_items, r)

    # One-time graph prep (pad + bf16 cast + tile choice), reused per forward.
    A_p, tm, tk = prepare_graph(A_tilda)

    # Forward inputs
    users = jax.random.randint(k_bu, (batch,), 0, n_users)
    pos_items = jax.random.randint(k_bp, (batch,), 0, n_items)
    neg_items = jax.random.randint(k_bn, (batch,), 0, n_items)

    out = lightgcn_forward(E0, A_p, users, pos_items, neg_items,
                           n_users=n_users, n_items=n_items, n_layers=n_layers,
                           tm=tm, tk=tk)
    out = jax.block_until_ready(out)

    # 1) Kernel-mechanics check: reference with identically rounded inputs.
    ref_bf = lightgcn_ref(E0, A_tilda, users, pos_items, neg_items,
                          n_users, n_layers, bf16_inputs=True)
    # 2) Module-semantics check: exact f32 PyTorch forward (looser tolerance
    #    because the kernel streams A/E products in bf16 with f32 accumulation).
    ref_f32 = lightgcn_ref(E0, A_tilda, users, pos_items, neg_items,
                           n_users, n_layers, bf16_inputs=False)

    for o, rb, rf in zip(out, ref_bf, ref_f32):
        assert o.shape == rf.shape and o.dtype == jnp.float32
        assert jnp.allclose(o, rb, rtol=1e-3, atol=1e-4), "kernel vs bf16 reference mismatch"
        assert jnp.allclose(o, rf, rtol=5e-2, atol=5e-3), "kernel vs f32 module reference mismatch"

    print("KERNEL_OK")
</pallas_src>

<mosaic_0001>
module attributes {stable_mosaic.version = 11 : i64} {
  func.func @_lgc_layer_kernel(%arg0: i32, %arg1: i32, %arg2: memref<128x256xbf16, #tpu.memory_space<vmem>>, %arg3: memref<256x128xf32, #tpu.memory_space<vmem>>, %arg4: memref<128x128xf32, #tpu.memory_space<vmem>>, %arg5: memref<128x128xf32, #tpu.memory_space<vmem>>) attributes {dimension_semantics = [#tpu.dimension_semantics<parallel>, #tpu.dimension_semantics<arbitrary>], iteration_bounds = array<i64: 2, 1>, scalar_prefetch = 0 : i64, scratch_operands = 0 : i64, tpu.core_type = #tpu.core_type<tc>, window_params = [{transform_indices = @transform_0, window_bounds = array<i64: 128, 256>}, {pipeline_mode = #tpu.pipeline_mode<synchronous>, transform_indices = @transform_1, window_bounds = array<i64: 256, 128>}, {transform_indices = @transform_2, window_bounds = array<i64: 128, 128>}, {transform_indices = @transform_3, window_bounds = array<i64: 128, 128>}]} {
    %c0_i32 = arith.constant 0 : i32
    %0 = arith.cmpi eq, %arg1, %c0_i32 : i32
    %1 = arith.extui %0 : i1 to i32
    %c0_i32_0 = arith.constant 0 : i32
    %2 = arith.cmpi ne, %1, %c0_i32_0 : i32
    scf.if %2 {
      %c0_7 = arith.constant 0 : index
      %c0_8 = arith.constant 0 : index
      %13 = vector.load %arg4[%c0_7, %c0_8] : memref<128x128xf32, #tpu.memory_space<vmem>>, vector<128x128xf32>
      %c0_9 = arith.constant 0 : index
      %c0_10 = arith.constant 0 : index
      %14 = vector.load %arg5[%c0_9, %c0_10] : memref<128x128xf32, #tpu.memory_space<vmem>>, vector<128x128xf32>
      tpu.vector_store %arg5[%c0_9, %c0_10], %13 {strides = array<i32>} : memref<128x128xf32, #tpu.memory_space<vmem>>, vector<128x128xf32>,
    } else {
    }
    %c256_i32 = arith.constant 256 : i32
    %3 = arith.muli %arg1, %c256_i32 : i32
    %4 = tpu.assume_multiple %3, 256 : i32
    %5 = arith.index_cast %4 : i32 to index
    %c0 = arith.constant 0 : index
    %6 = vector.load %arg3[%5, %c0] : memref<256x128xf32, #tpu.memory_space<vmem>>, vector<256x128xf32>
    %c0_1 = arith.constant 0 : index
    %c0_2 = arith.constant 0 : index
    %7 = vector.load %arg5[%c0_1, %c0_2] : memref<128x128xf32, #tpu.memory_space<vmem>>, vector<128x128xf32>
    %c0_3 = arith.constant 0 : index
    %c0_4 = arith.constant 0 : index
    %8 = vector.load %arg2[%c0_3, %c0_4] : memref<128x256xbf16, #tpu.memory_space<vmem>>, vector<128x256xbf16>
    %9 = arith.truncf %6 : vector<256x128xf32> to vector<256x128xbf16>
    %cst = arith.constant dense<0.000000e+00> : vector<128x128xf32>
    %10 = tpu.matmul %8, %9, %cst {dimension_numbers = #tpu.dot_dimension_numbers<[1], [0], [0], [1], [0, 0, 1, 1], [], []>} : vector<128x256xbf16>, vector<256x128xbf16>, vector<128x128xf32> -> vector<128x128xf32>
    %11 = arith.addf %7, %10 : vector<128x128xf32>
    %c0_5 = arith.constant 0 : index
    %c0_6 = arith.constant 0 : index
    %12 = vector.load %arg5[%c0_5, %c0_6] : memref<128x128xf32, #tpu.memory_space<vmem>>, vector<128x128xf32>
    tpu.vector_store %arg5[%c0_5, %c0_6], %11 {strides = array<i32>} : memref<128x128xf32, #tpu.memory_space<vmem>>, vector<128x128xf32>,
    return
  }
  func.func @transform_0(%arg0: i32, %arg1: i32) -> (i32, i32) {
    %c0_i32 = arith.constant 0 : i32
    return %arg0, %arg1 : i32, i32
  }
  func.func @transform_1(%arg0: i32, %arg1: i32) -> (i32, i32) {
    %c0_i32 = arith.constant 0 : i32
    %c0_i32_0 = arith.constant 0 : i32
    %c0_i32_1 = arith.constant 0 : i32
    return %c0_i32, %c0_i32_0 : i32, i32
  }
  func.func @transform_2(%arg0: i32, %arg1: i32) -> (i32, i32) {
    %c0_i32 = arith.constant 0 : i32
    %c0_i32_0 = arith.constant 0 : i32
    return %arg0, %c0_i32 : i32, i32
  }
  func.func @transform_3(%arg0: i32, %arg1: i32) -> (i32, i32) {
    %c0_i32 = arith.constant 0 : i32
    %c0_i32_0 = arith.constant 0 : i32
    return %arg0, %c0_i32 : i32, i32
  }
}

module attributes {stable_mosaic.version = 11 : i64} {
  func.func @_lgc_layer_kernel(%arg0: i32, %arg1: i32, %arg2: memref<128x256xbf16, #tpu.memory_space<vmem>>, %arg3: memref<256x128xf32, #tpu.memory_space<vmem>>, %arg4: memref<128x128xf32, #tpu.memory_space<vmem>>, %arg5: memref<128x128xf32, #tpu.memory_space<vmem>>) attributes {dimension_semantics = [#tpu.dimension_semantics<parallel>, #tpu.dimension_semantics<arbitrary>], iteration_bounds = array<i64: 2, 1>, scalar_prefetch = 0 : i64, scratch_operands = 0 : i64, tpu.core_type = #tpu.core_type<tc>, window_params = [{transform_indices = @transform_0, window_bounds = array<i64: 128, 256>}, {pipeline_mode = #tpu.pipeline_mode<synchronous>, transform_indices = @transform_1, window_bounds = array<i64: 256, 128>}, {transform_indices = @transform_2, window_bounds = array<i64: 128, 128>}, {transform_indices = @transform_3, window_bounds = array<i64: 128, 128>}]} {
    %c0_i32 = arith.constant 0 : i32
    %0 = arith.cmpi eq, %arg1, %c0_i32 : i32
    %1 = arith.extui %0 : i1 to i32
    %c0_i32_0 = arith.constant 0 : i32
    %2 = arith.cmpi ne, %1, %c0_i32_0 : i32
    scf.if %2 {
      %c0_9 = arith.constant 0 : index
      %c0_10 = arith.constant 0 : index
      %16 = vector.load %arg4[%c0_9, %c0_10] : memref<128x128xf32, #tpu.memory_space<vmem>>, vector<128x128xf32>
      %c0_11 = arith.constant 0 : index
      %c0_12 = arith.constant 0 : index
      %17 = vector.load %arg5[%c0_11, %c0_12] : memref<128x128xf32, #tpu.memory_space<vmem>>, vector<128x128xf32>
      tpu.vector_store %arg5[%c0_11, %c0_12], %16 {strides = array<i32>} : memref<128x128xf32, #tpu.memory_space<vmem>>, vector<128x128xf32>,
    } else {
    }
    %c256_i32 = arith.constant 256 : i32
    %3 = arith.muli %arg1, %c256_i32 : i32
    %4 = tpu.assume_multiple %3, 256 : i32
    %5 = arith.index_cast %4 : i32 to index
    %c0 = arith.constant 0 : index
    %6 = vector.load %arg3[%5, %c0] : memref<256x128xf32, #tpu.memory_space<vmem>>, vector<256x128xf32>
    %c0_1 = arith.constant 0 : index
    %c0_2 = arith.constant 0 : index
    %7 = vector.load %arg5[%c0_1, %c0_2] : memref<128x128xf32, #tpu.memory_space<vmem>>, vector<128x128xf32>
    %c0_3 = arith.constant 0 : index
    %c0_4 = arith.constant 0 : index
    %8 = vector.load %arg2[%c0_3, %c0_4] : memref<128x256xbf16, #tpu.memory_space<vmem>>, vector<128x256xbf16>
    %9 = arith.truncf %6 : vector<256x128xf32> to vector<256x128xbf16>
    %cst = arith.constant dense<0.000000e+00> : vector<128x128xf32>
    %10 = tpu.matmul %8, %9, %cst {dimension_numbers = #tpu.dot_dimension_numbers<[1], [0], [0], [1], [0, 0, 1, 1], [], []>} : vector<128x256xbf16>, vector<256x128xbf16>, vector<128x128xf32> -> vector<128x128xf32>
    %11 = arith.addf %7, %10 : vector<128x128xf32>
    %c0_5 = arith.constant 0 : index
    %c0_6 = arith.constant 0 : index
    %12 = vector.load %arg5[%c0_5, %c0_6] : memref<128x128xf32, #tpu.memory_space<vmem>>, vector<128x128xf32>
    tpu.vector_store %arg5[%c0_5, %c0_6], %11 {strides = array<i32>} : memref<128x128xf32, #tpu.memory_space<vmem>>, vector<128x128xf32>,
    %c0_i32_7 = arith.constant 0 : i32
    %13 = arith.cmpi eq, %arg1, %c0_i32_7 : i32
    %14 = arith.extui %13 : i1 to i32
    %c0_i32_8 = arith.constant 0 : i32
    %15 = arith.cmpi ne, %14, %c0_i32_8 : i32
    scf.if %15 {
      %c0_9 = arith.constant 0 : index
      %c0_10 = arith.constant 0 : index
      %16 = vector.load %arg5[%c0_9, %c0_10] : memref<128x128xf32, #tpu.memory_space<vmem>>, vector<128x128xf32>
      %cst_11 = arith.constant 2.500000e-01 : f32
      %17 = vector.broadcast %cst_11 : f32 to vector<128x128xf32>
      %18 = arith.mulf %16, %17 : vector<128x128xf32>
      %c0_12 = arith.constant 0 : index
      %c0_13 = arith.constant 0 : index
      %19 = vector.load %arg5[%c0_12, %c0_13] : memref<128x128xf32, #tpu.memory_space<vmem>>, vector<128x128xf32>
      tpu.vector_store %arg5[%c0_12, %c0_13], %18 {strides = array<i32>} : memref<128x128xf32, #tpu.memory_space<vmem>>, vector<128x128xf32>,
    } else {
    }
    return
  }
  func.func @transform_0(%arg0: i32, %arg1: i32) -> (i32, i32) {
    %c0_i32 = arith.constant 0 : i32
    return %arg0, %arg1 : i32, i32
  }
  func.func @transform_1(%arg0: i32, %arg1: i32) -> (i32, i32) {
    %c0_i32 = arith.constant 0 : i32
    %c0_i32_0 = arith.constant 0 : i32
    %c0_i32_1 = arith.constant 0 : i32
    return %c0_i32, %c0_i32_0 : i32, i32
  }
  func.func @transform_2(%arg0: i32, %arg1: i32) -> (i32, i32) {
    %c0_i32 = arith.constant 0 : i32
    %c0_i32_0 = arith.constant 0 : i32
    return %arg0, %c0_i32 : i32, i32
  }
  func.func @transform_3(%arg0: i32, %arg1: i32) -> (i32, i32) {
    %c0_i32 = arith.constant 0 : i32
    %c0_i32_0 = arith.constant 0 : i32
    return %arg0, %c0_i32 : i32, i32
  }
}

</mosaic_0001>

<llo_original>
// kernel: lightgcn_forward.5
$region0: #{lightgcn_forward.5}
  #allocation0 [shape = 'u32[]', space=smem, size = 0x4, offset = 0x4, fixed_abs, tag = 'smem constant byte address 0x4 - core index']
  #allocation1 [shape = 'u32[144,128]{1,0:T(1,128)}', space=vmem, size = 0x12000, scoped, tag = 'internal scratch']
  %s0 = inlined_call_operand.vmem [shape: bf16[256,256], index: 0, kind: input, shape index: {}]
  %s1 = inlined_call_operand.vmem [shape: f32[256,128], index: 1, kind: input, shape index: {}, may-alias: {1,2}]
  %s2 = inlined_call_operand.vmem [shape: f32[256,128], index: 2, kind: input, shape index: {}, may-alias: {1,2}]
  %s3 = inlined_call_operand.vmem [shape: f32[256,128], index: 3, kind: output, shape index: {}]
  %s4 = sld [smem:[#allocation0]]
  $region53: #{lightgcn_forward.5} parent=0
    _
  %s6 = ssub.s32 1, %s4
  %s7 = scalar_select 0, %s6, %s4
  loop: start=0, step=1, limit=4
  $region2: #{lightgcn_forward.5} parent=0 // loop_pre_header
    _
  $region3: #{lightgcn_forward.5} parent=0 // loop_header
    %s9 = sphi 0, %s13
    %p10 = scmp.ge.s32.totalorder %s9, 4
    %s16 = sphi 0, %s28
    %s17 = sphi 0, %s24
    %s18 = sphi 0, %s16
    %s19 = sphi 0, %s17
    %s20 = sphi 0, %s18
    %s21 = sphi 0, %s19
    %s33 = sphi 0, %s35
    %s36 = sphi 0, %s33
    %s37 = sphi 0, %s36
    %s53 = sphi 0, %s37
    %s57 = sphi 0, %s57
    %s59 = sphi 0, %s57
    %s60 = sphi 0, %s59
    %s74 = sphi 0, %s60
    %s80 = sphi 0, %s82
    %s83 = sphi 0, %s80
    %s84 = sphi 0, %s83
    %s100 = sphi 0, %s84
    %s106 = sphi 0, %s108
    %s109 = sphi 0, %s106
    %s110 = sphi 0, %s109
    %s126 = sphi 0, %s110
  $region4: #{lightgcn_forward.5} parent=0 // loop_header_branch
    %12 = sbr.rel (%p10) target = $region8
  $region5: #{lightgcn_forward.5} parent=0 // loop_body
    %s14 = ssub.s32 %s9, 1
    %s15 = ssub.s32 %s9, 2
    %s22 = sadd.s32 1, %s17
    %p23 = scmp.ge.s32.totalorder %s22, 1
    %s24 = scalar_select %p23, 0, %s22
    %s25 = sadd.s32 1, %s16
    %s26 = scalar_select %p23, %s25, %s16
    %p27 = scmp.ge.s32.totalorder %s26, 2
    %s28 = scalar_select %p27, 0, %s26
    %s29 = ssub.s32 %s16, %s28
    %s30 = ssub.s32 %s17, %s24
    %s31 = sor.u32 %s29, %s30
    %p32 = scmp.eq.s32.totalorder %s31, 0
    %s34 = sadd.s32 %s33, 1
    %s35 = scalar_select %p32, %s33, %s34
    %p38 = pneg %p32
    %p39 = scmp.eq.s32.totalorder %s9, 1
    %p40 = por %p38, %p39
    %p41 = scmp.ne.s32.totalorder %s33, %s36
    %p42 = scmp.eq.s32.totalorder %s9, 0
    %p43 = por %p41, %p42
    %p44 = scmp.ne.s32.totalorder %s33, %s36
    %p45 = scmp.eq.s32.totalorder %s14, 1
    %p46 = por %p44, %p45
    %p47 = scmp.ne.s32.totalorder %s36, %s37
    %p48 = scmp.eq.s32.totalorder %s14, 0
    %p49 = por %p47, %p48
    %p50 = scmp.ne.s32.totalorder %s36, %s37
    %p51 = scmp.eq.s32.totalorder %s15, 1
    %p52 = por %p50, %p51
    %p54 = scmp.ne.s32.totalorder %s37, %s53
    %p55 = scmp.eq.s32.totalorder %s15, 0
    %p56 = por %p54, %p55
    %s58 = sadd.s32 %s57, 1
    %p61 = scmp.eq.s32.totalorder %s9, 1
    %p62 = scmp.ne.s32.totalorder %s57, %s59
    %p63 = scmp.eq.s32.totalorder %s9, 0
    %p64 = por %p62, %p63
    %p65 = scmp.ne.s32.totalorder %s57, %s59
    %p66 = scmp.eq.s32.totalorder %s14, 1
    %p67 = por %p65, %p66
    %p68 = scmp.ne.s32.totalorder %s59, %s60
    %p69 = scmp.eq.s32.totalorder %s14, 0
    %p70 = por %p68, %p69
    %p71 = scmp.ne.s32.totalorder %s59, %s60
    %p72 = scmp.eq.s32.totalorder %s15, 1
    %p73 = por %p71, %p72
    %p75 = scmp.ne.s32.totalorder %s60, %s74
    %p76 = scmp.eq.s32.totalorder %s15, 0
    %p77 = por %p75, %p76
    %s78 = ssub.s32 %s16, %s28
    %p79 = scmp.eq.s32.totalorder %s78, 0
    %s81 = sadd.s32 %s80, 1
    %s82 = scalar_select %p79, %s80, %s81
    %p85 = pneg %p79
    %p86 = scmp.eq.s32.totalorder %s9, 1
    %p87 = por %p85, %p86
    %p88 = scmp.ne.s32.totalorder %s80, %s83
    %p89 = scmp.eq.s32.totalorder %s9, 0
    %p90 = por %p88, %p89
    %p91 = scmp.ne.s32.totalorder %s80, %s83
    %p92 = scmp.eq.s32.totalorder %s14, 1
    %p93 = por %p91, %p92
    %p94 = scmp.ne.s32.totalorder %s83, %s84
    %p95 = scmp.eq.s32.totalorder %s14, 0
    %p96 = por %p94, %p95
    %p97 = scmp.ne.s32.totalorder %s83, %s84
    %p98 = scmp.eq.s32.totalorder %s15, 1
    %p99 = por %p97, %p98
    %p101 = scmp.ne.s32.totalorder %s84, %s100
    %p102 = scmp.eq.s32.totalorder %s15, 0
    %p103 = por %p101, %p102
    %s104 = ssub.s32 %s16, %s28
    %p105 = scmp.eq.s32.totalorder %s104, 0
    %s107 = sadd.s32 %s106, 1
    %s108 = scalar_select %p105, %s106, %s107
    %p111 = pneg %p105
    %p112 = scmp.eq.s32.totalorder %s9, 1
    %p113 = por %p111, %p112
    %p114 = scmp.ne.s32.totalorder %s106, %s109
    %p115 = scmp.eq.s32.totalorder %s9, 0
    %p116 = por %p114, %p115
    %p117 = scmp.ne.s32.totalorder %s106, %s109
    %p118 = scmp.eq.s32.totalorder %s14, 1
    %p119 = por %p117, %p118
    %p120 = scmp.ne.s32.totalorder %s109, %s110
    %p121 = scmp.eq.s32.totalorder %s14, 0
    %p122 = por %p120, %p121
    %p123 = scmp.ne.s32.totalorder %s109, %s110
    %p124 = scmp.eq.s32.totalorder %s15, 1
    %p125 = por %p123, %p124
    %p127 = scmp.ne.s32.totalorder %s110, %s126
    %p128 = scmp.eq.s32.totalorder %s15, 0
    %p129 = por %p127, %p128
    %p130 = scmp.le.s32.totalorder 1, %s9
    %p131 = scmp.lt.s32.totalorder %s9, 3
    %p132 = pnand %p130, %p131
    %p133 = pneg %p132
    // Predicated region
    $region9: #{lightgcn_forward.5} parent=5 // pred_check
      _
    $region10: #{lightgcn_forward.5} parent=5 // pred_check_branch
      %135 = sbr.rel (%p132) target = $region12
    $region11: #{lightgcn_forward.5} parent=5 // pred_region
      %s136 = ssub.s32 %s9, 1
      // Predicated region
      $region13: #{lightgcn_forward.5} parent=11 // pred_check
        %p137 = pneg %p70
      $region14: #{lightgcn_forward.5} parent=11 // pred_check_branch
        %139 = sbr.rel (%p137) target = $region16
      $region15: #{lightgcn_forward.5} parent=11 // pred_region
        _
      $region16: #{lightgcn_forward.5} parent=11 // pred_fallthru
        _
    $region12: #{lightgcn_forward.5} parent=5 // pred_fallthru
      _
    %p140 = scmp.lt.s32.totalorder %s9, 2
    // Predicated region
    $region17: #{lightgcn_forward.5} parent=5 // pred_check
      %p141 = pneg %p140
    $region18: #{lightgcn_forward.5} parent=5 // pred_check_branch
      %143 = sbr.rel (%p141) target = $region20
    $region19: #{lightgcn_forward.5} parent=5 // pred_region
      // Predicated region
      $region21: #{lightgcn_forward.5} parent=19 // pred_check
        %p144 = pneg %p43
      $region22: #{lightgcn_forward.5} parent=19 // pred_check_branch
        %146 = sbr.rel (%p144) target = $region24
      $region23: #{lightgcn_forward.5} parent=19 // pred_region
        %s147 = smul.u32 16, %s16
        %s148 = smul.u32 2, %s17
        %p149 = scmp.lt.s32.totalorder %s147, 31
        %s150 = scalar_select %p149, %s147, 31
        %p151 = scmp.lt.s32.totalorder %s148, 1
        %s152 = scalar_select %p151, %s148, 1
        %s153 = smul.addr %s150, 2
        %s154 = sadd.s32 %s152, %s153
        %s155 = smul.addr %s154, 4
        %s156 = scalar_lea.vmem %s0, %s155
        %s157 = smul.u32 16, %s16
        %s158 = smul.u32 2, %s17
      $region24: #{lightgcn_forward.5} parent=19 // pred_fallthru
        _
      // Predicated region
      $region25: #{lightgcn_forward.5} parent=19 // pred_check
        %p159 = pneg %p90
      $region26: #{lightgcn_forward.5} parent=19 // pred_check_branch
        %161 = sbr.rel (%p159) target = $region28
      $region27: #{lightgcn_forward.5} parent=19 // pred_region
        %s162 = smul.u32 16, %s16
        %p163 = scmp.lt.s32.totalorder %s162, 31
        %s164 = scalar_select %p163, %s162, 31
        %s165 = smul.addr %s164, 8
        %s166 = scalar_lea.vmem %s2, %s165
        %s167 = smul.u32 16, %s16
      $region28: #{lightgcn_forward.5} parent=19 // pred_fallthru
        _
    $region20: #{lightgcn_forward.5} parent=5 // pred_fallthru
      _
    %p168 = scmp.le.s32.totalorder 1, %s9
    %p169 = scmp.lt.s32.totalorder %s9, 3
    %p170 = pnand %p168, %p169
    %p171 = pneg %p170
    // Predicated region
    $region29: #{lightgcn_forward.5} parent=5 // pred_check
      _
    $region30: #{lightgcn_forward.5} parent=5 // pred_check_branch
      %173 = sbr.rel (%p170) target = $region32
    $region31: #{lightgcn_forward.5} parent=5 // pred_region
      %s174 = ssub.s32 %s9, 1
      %s175 = smul.u32 16, %s18
      %s176 = smul.u32 2, %s19
      %p177 = scmp.lt.s32.totalorder %s175, 31
      %s178 = scalar_select %p177, %s175, 31
      %p179 = scmp.lt.s32.totalorder %s176, 1
      %s180 = scalar_select %p179, %s176, 1
      %s181 = smul.addr %s178, 2
      %s182 = sadd.s32 %s180, %s181
      %s183 = smul.addr %s182, 4
      %s184 = scalar_lea.vmem %s0, %s183
      %p185 = pneg %p49
      %p186 = pneg %p46
      %p187 = pneg %p70
      %p188 = pneg %p67
      %s189 = smul.u32 16, %s18
      %p190 = scmp.lt.s32.totalorder %s189, 31
      %s191 = scalar_select %p190, %s189, 31
      %s192 = smul.addr %s191, 8
      %s193 = scalar_lea.vmem %s2, %s192
      %p194 = pneg %p96
      %p195 = pneg %p93
      %p196 = pneg %p122
      %p197 = pneg %p119
      %s198 = smul.u32 16, %s18
      %p199 = scmp.lt.s32.totalorder %s198, 31
      %s200 = scalar_select %p199, %s198, 31
      %s201 = smul.addr %s200, 8
      %s202 = scalar_lea.vmem %s3, %s201
      %s203 = smul.u32 16, %s18
      %s204 = smul.u32 2, %s19
      %p205 = scmp.lt.s32.totalorder %s203, 31
      %s206 = scalar_select %p205, %s203, 31
      %p207 = scmp.lt.s32.totalorder %s204, 1
      %s208 = scalar_select %p207, %s204, 1
      %s209 = smul.addr %s206, 2
      %s210 = sadd.s32 %s208, %s209
      %s211 = smul.addr %s210, 4
      %s212 = scalar_lea.vmem %s0, %s211
      %s213 = smul.u32 16, %s18
      %s214 = smul.u32 2, %s19
      %s215 = smul.u32 16, %s18
      %p216 = scmp.lt.s32.totalorder %s215, 31
      %s217 = scalar_select %p216, %s215, 31
      %s218 = smul.addr %s217, 8
      %s219 = scalar_lea.vmem %s2, %s218
      %s220 = smul.u32 16, %s18
      %s221 = smul.u32 16, %s18
      %p222 = scmp.lt.s32.totalorder %s221, 31
      %s223 = scalar_select %p222, %s221, 31
      %s224 = smul.addr %s223, 8
      %s225 = scalar_lea.vmem %s3, %s224
      %s226 = smul.u32 16, %s18
      %p228 = scmp.eq.s32.totalorder %s19, 0
      // Predicated region
      $region33: #{lightgcn_forward.5} parent=31 // pred_check
        %p229 = pneg %p228
      $region34: #{lightgcn_forward.5} parent=31 // pred_check_branch
        %231 = sbr.rel (%p229) target = $region36
      $region35: #{lightgcn_forward.5} parent=31 // pred_region
        %v232 = vld [vmem:[%s219] sm:$0xff]
        %v233 = vld [vmem:[%s219 + $0x8] sm:$0xff]
        %v234 = vld [vmem:[%s219 + $0x10] sm:$0xff]
        %v235 = vld [vmem:[%s219 + $0x18] sm:$0xff]
        %v236 = vld [vmem:[%s219 + $0x20] sm:$0xff]
        %v237 = vld [vmem:[%s219 + $0x28] sm:$0xff]
        %v238 = vld [vmem:[%s219 + $0x30] sm:$0xff]
        %v239 = vld [vmem:[%s219 + $0x38] sm:$0xff]
        %v240 = vld [vmem:[%s219 + $0x40] sm:$0xff]
        %v241 = vld [vmem:[%s219 + $0x48] sm:$0xff]
        %v242 = vld [vmem:[%s219 + $0x50] sm:$0xff]
        %v243 = vld [vmem:[%s219 + $0x58] sm:$0xff]
        %v244 = vld [vmem:[%s219 + $0x60] sm:$0xff]
        %v245 = vld [vmem:[%s219 + $0x68] sm:$0xff]
        %v246 = vld [vmem:[%s219 + $0x70] sm:$0xff]
        %v247 = vld [vmem:[%s219 + $0x78] sm:$0xff]
        %248 = vst [vmem:[%s225] sm:$0xff] %v232
        %249 = vst [vmem:[%s225 + $0x8] sm:$0xff] %v233
        %250 = vst [vmem:[%s225 + $0x10] sm:$0xff] %v234
        %251 = vst [vmem:[%s225 + $0x18] sm:$0xff] %v235
        %252 = vst [vmem:[%s225 + $0x20] sm:$0xff] %v236
        %253 = vst [vmem:[%s225 + $0x28] sm:$0xff] %v237
        %254 = vst [vmem:[%s225 + $0x30] sm:$0xff] %v238
        %255 = vst [vmem:[%s225 + $0x38] sm:$0xff] %v239
        %256 = vst [vmem:[%s225 + $0x40] sm:$0xff] %v240
        %257 = vst [vmem:[%s225 + $0x48] sm:$0xff] %v241
        %258 = vst [vmem:[%s225 + $0x50] sm:$0xff] %v242
        %259 = vst [vmem:[%s225 + $0x58] sm:$0xff] %v243
        %260 = vst [vmem:[%s225 + $0x60] sm:$0xff] %v244
        %261 = vst [vmem:[%s225 + $0x68] sm:$0xff] %v245
        %262 = vst [vmem:[%s225 + $0x70] sm:$0xff] %v246
        %263 = vst [vmem:[%s225 + $0x78] sm:$0xff] %v247
      $region36: #{lightgcn_forward.5} parent=31 // pred_fallthru
        _
      %s264 = smul.u32 %s19, 256
      %s265 = scalar_lea.vmem %s1, %s264
      %v266 = vld [vmem:[%s265] sm:$0xff]
      %v267 = vld [vmem:[%s265 + $0x8] sm:$0xff]
      %v268 = vld [vmem:[%s265 + $0x10] sm:$0xff]
      %v269 = vld [vmem:[%s265 + $0x18] sm:$0xff]
      %v270 = vld [vmem:[%s265 + $0x20] sm:$0xff]
      %v271 = vld [vmem:[%s265 + $0x28] sm:$0xff]
      %v272 = vld [vmem:[%s265 + $0x30] sm:$0xff]
      %v273 = vld [vmem:[%s265 + $0x38] sm:$0xff]
      %v274 = vld [vmem:[%s265 + $0x40] sm:$0xff]
      %v275 = vld [vmem:[%s265 + $0x48] sm:$0xff]
      %v276 = vld [vmem:[%s265 + $0x50] sm:$0xff]
      %v277 = vld [vmem:[%s265 + $0x58] sm:$0xff]
      %v278 = vld [vmem:[%s265 + $0x60] sm:$0xff]
      %v279 = vld [vmem:[%s265 + $0x68] sm:$0xff]
      %v280 = vld [vmem:[%s265 + $0x70] sm:$0xff]
      %v281 = vld [vmem:[%s265 + $0x78] sm:$0xff]
      %v282 = vld [vmem:[%s265 + $0x80] sm:$0xff]
      %v283 = vld [vmem:[%s265 + $0x88] sm:$0xff]
      %v284 = vld [vmem:[%s265 + $0x90] sm:$0xff]
      %v285 = vld [vmem:[%s265 + $0x98] sm:$0xff]
      %v286 = vld [vmem:[%s265 + $0xa0] sm:$0xff]
      %v287 = vld [vmem:[%s265 + $0xa8] sm:$0xff]
      %v288 = vld [vmem:[%s265 + $0xb0] sm:$0xff]
      %v289 = vld [vmem:[%s265 + $0xb8] sm:$0xff]
      %v290 = vld [vmem:[%s265 + $0xc0] sm:$0xff]
      %v291 = vld [vmem:[%s265 + $0xc8] sm:$0xff]
      %v292 = vld [vmem:[%s265 + $0xd0] sm:$0xff]
      %v293 = vld [vmem:[%s265 + $0xd8] sm:$0xff]
      %v294 = vld [vmem:[%s265 + $0xe0] sm:$0xff]
      %v295 = vld [vmem:[%s265 + $0xe8] sm:$0xff]
      %v296 = vld [vmem:[%s265 + $0xf0] sm:$0xff]
      %v297 = vld [vmem:[%s265 + $0xf8] sm:$0xff]
      %v298 = vld [vmem:[%s225] sm:$0xff]
      %v299 = vld [vmem:[%s225 + $0x8] sm:$0xff]
      %v300 = vld [vmem:[%s225 + $0x10] sm:$0xff]
      %v301 = vld [vmem:[%s225 + $0x18] sm:$0xff]
      %v302 = vld [vmem:[%s225 + $0x20] sm:$0xff]
      %v303 = vld [vmem:[%s225 + $0x28] sm:$0xff]
      %v304 = vld [vmem:[%s225 + $0x30] sm:$0xff]
      %v305 = vld [vmem:[%s225 + $0x38] sm:$0xff]
      %v306 = vld [vmem:[%s225 + $0x40] sm:$0xff]
      %v307 = vld [vmem:[%s225 + $0x48] sm:$0xff]
      %v308 = vld [vmem:[%s225 + $0x50] sm:$0xff]
      %v309 = vld [vmem:[%s225 + $0x58] sm:$0xff]
      %v310 = vld [vmem:[%s225 + $0x60] sm:$0xff]
      %v311 = vld [vmem:[%s225 + $0x68] sm:$0xff]
      %v312 = vld [vmem:[%s225 + $0x70] sm:$0xff]
      %v313 = vld [vmem:[%s225 + $0x78] sm:$0xff]
      %v314 = vld [vmem:[%s212] sm:$0xff]
      %v315 = vld [vmem:[%s212 + $0x8] sm:$0xff]
      %v316 = vld [vmem:[%s212 + $0x10] sm:$0xff]
      %v317 = vld [vmem:[%s212 + $0x18] sm:$0xff]
      %v318 = vld [vmem:[%s212 + $0x20] sm:$0xff]
      %v319 = vld [vmem:[%s212 + $0x28] sm:$0xff]
      %v320 = vld [vmem:[%s212 + $0x30] sm:$0xff]
      %v321 = vld [vmem:[%s212 + $0x38] sm:$0xff]
      %v322 = vld [vmem:[%s212 + $0x40] sm:$0xff]
      %v323 = vld [vmem:[%s212 + $0x48] sm:$0xff]
      %v324 = vld [vmem:[%s212 + $0x50] sm:$0xff]
      %v325 = vld [vmem:[%s212 + $0x58] sm:$0xff]
      %v326 = vld [vmem:[%s212 + $0x60] sm:$0xff]
      %v327 = vld [vmem:[%s212 + $0x68] sm:$0xff]
      %v328 = vld [vmem:[%s212 + $0x70] sm:$0xff]
      %v329 = vld [vmem:[%s212 + $0x78] sm:$0xff]
      %v330 = vpack.c.bf16 %v267, %v266
      %v331 = vpack.c.bf16 %v269, %v268
      %v332 = vpack.c.bf16 %v271, %v270
      %v333 = vpack.c.bf16 %v273, %v272
      %v334 = vpack.c.bf16 %v275, %v274
      %v335 = vpack.c.bf16 %v277, %v276
      %v336 = vpack.c.bf16 %v279, %v278
      %v337 = vpack.c.bf16 %v281, %v280
      %v338 = vpack.c.bf16 %v283, %v282
      %v339 = vpack.c.bf16 %v285, %v284
      %v340 = vpack.c.bf16 %v287, %v286
      %v341 = vpack.c.bf16 %v289, %v288
      %v342 = vpack.c.bf16 %v291, %v290
      %v343 = vpack.c.bf16 %v293, %v292
      %v344 = vpack.c.bf16 %v295, %v294
      %v345 = vpack.c.bf16 %v297, %v296
      %v362 = vunpack.c.l.b16 %v314
      %v363 = vunpack.c.h.b16 %v314
      %v364 = vunpack.c.l.b16 %v315
      %v365 = vunpack.c.h.b16 %v315
      %v366 = vunpack.c.l.b16 %v316
      %v367 = vunpack.c.h.b16 %v316
      %v368 = vunpack.c.l.b16 %v317
      %v369 = vunpack.c.h.b16 %v317
      %v370 = vunpack.c.l.b16 %v318
      %v371 = vunpack.c.h.b16 %v318
      %v372 = vunpack.c.l.b16 %v319
      %v373 = vunpack.c.h.b16 %v319
      %v374 = vunpack.c.l.b16 %v320
      %v375 = vunpack.c.h.b16 %v320
      %v376 = vunpack.c.l.b16 %v321
      %v377 = vunpack.c.h.b16 %v321
      %v378 = vunpack.c.l.b16 %v322
      %v379 = vunpack.c.h.b16 %v322
      %v380 = vunpack.c.l.b16 %v323
      %v381 = vunpack.c.h.b16 %v323
      %v382 = vunpack.c.l.b16 %v324
      %v383 = vunpack.c.h.b16 %v324
      %v384 = vunpack.c.l.b16 %v325
      %v385 = vunpack.c.h.b16 %v325
      %v386 = vunpack.c.l.b16 %v326
      %v387 = vunpack.c.h.b16 %v326
      %v388 = vunpack.c.l.b16 %v327
      %v389 = vunpack.c.h.b16 %v327
      %v390 = vunpack.c.l.b16 %v328
      %v391 = vunpack.c.h.b16 %v328
      %v392 = vunpack.c.l.b16 %v329
      %v393 = vunpack.c.h.b16 %v329
      %v394 = vpack.c.b16 %v364, %v362
      %v395 = vpack.c.b16 %v365, %v363
      %v396 = vpack.c.b16 %v368, %v366
      %v397 = vpack.c.b16 %v369, %v367
      %v398 = vpack.c.b16 %v372, %v370
      %v399 = vpack.c.b16 %v373, %v371
      %v400 = vpack.c.b16 %v376, %v374
      %v401 = vpack.c.b16 %v377, %v375
      %v402 = vpack.c.b16 %v380, %v378
      %v403 = vpack.c.b16 %v381, %v379
      %v404 = vpack.c.b16 %v384, %v382
      %v405 = vpack.c.b16 %v385, %v383
      %v406 = vpack.c.b16 %v388, %v386
      %v407 = vpack.c.b16 %v389, %v387
      %v408 = vpack.c.b16 %v392, %v390
      %v409 = vpack.c.b16 %v393, %v391
      %426 = vmatprep.subr.bf16.mxu0 0
      %427 = vmatpush1.bf16.msra.mxu0 %v330
      %428 = vmatprep.subr.bf16.mxu0 0
      %429 = vmatpush1.bf16.msra.mxu0 %v331
      %430 = vmatprep.subr.bf16.mxu0 0
      %431 = vmatpush1.bf16.msra.mxu0 %v332
      %432 = vmatprep.subr.bf16.mxu0 0
      %433 = vmatpush1.bf16.msra.mxu0 %v333
      %434 = vmatprep.subr.bf16.mxu0 0
      %435 = vmatpush1.bf16.msra.mxu0 %v334
      %436 = vmatprep.subr.bf16.mxu0 0
      %437 = vmatpush1.bf16.msra.mxu0 %v335
      %438 = vmatprep.subr.bf16.mxu0 0
      %439 = vmatpush1.bf16.msra.mxu0 %v336
      %440 = vmatprep.subr.bf16.mxu0 0
      %441 = vmatpush1.bf16.msra.mxu0 %v337
      %442 = vmatprep.subr.bf16.mxu0 0
      %443 = vmatpush1.bf16.msra.mxu0 %v338
      %444 = vmatprep.subr.bf16.mxu0 0
      %445 = vmatpush1.bf16.msra.mxu0 %v339
      %446 = vmatprep.subr.bf16.mxu0 0
      %447 = vmatpush1.bf16.msra.mxu0 %v340
      %448 = vmatprep.subr.bf16.mxu0 0
      %449 = vmatpush1.bf16.msra.mxu0 %v341
      %450 = vmatprep.subr.bf16.mxu0 0
      %451 = vmatpush1.bf16.msra.mxu0 %v342
      %452 = vmatprep.subr.bf16.mxu0 0
      %453 = vmatpush1.bf16.msra.mxu0 %v343
      %454 = vmatprep.subr.bf16.mxu0 0
      %455 = vmatpush1.bf16.msra.mxu0 %v344
      %456 = vmatprep.subr.bf16.mxu0 0
      %457 = vmatpush1.bf16.msra.mxu0 %v345
      %458 = vmatprep.mubr.bf16.mxu0 %v395
      %459 = vmatmul.mubr.bf16.gmra.mrb[0].mxu0 %v394
      %v460 = vpop.f32.mrb[0].mxu0
      %v461 = vadd.f32 0.0, %v460
      %v462 = vpop.f32.mrb[0].mxu0
      %v463 = vpop.f32.mrb[0].mxu0
      %v464 = vadd.f32 0.0, %v463
      %v465 = vpop.f32.mrb[0].mxu0
      %466 = vmatprep.mubr.bf16.mxu0 %v397
      %467 = vmatmul.mubr.bf16.gmra.mrb[0].mxu0 %v396
      %v468 = vpop.f32.mrb[0].mxu0
      %v469 = vadd.f32 0.0, %v468
      %v470 = vpop.f32.mrb[0].mxu0
      %v471 = vpop.f32.mrb[0].mxu0
      %v472 = vadd.f32 0.0, %v471
      %v473 = vpop.f32.mrb[0].mxu0
      %474 = vmatprep.mubr.bf16.mxu0 %v399
      %475 = vmatmul.mubr.bf16.gmra.mrb[0].mxu0 %v398
      %v476 = vpop.f32.mrb[0].mxu0
      %v477 = vadd.f32 0.0, %v476
      %v478 = vpop.f32.mrb[0].mxu0
      %v479 = vpop.f32.mrb[0].mxu0
      %v480 = vadd.f32 0.0, %v479
      %v481 = vpop.f32.mrb[0].mxu0
      %482 = vmatprep.mubr.bf16.mxu0 %v401
      %483 = vmatmul.mubr.bf16.gmra.mrb[0].mxu0 %v400
      %v484 = vpop.f32.mrb[0].mxu0
      %v485 = vadd.f32 0.0, %v484
      %v486 = vpop.f32.mrb[0].mxu0
      %v487 = vpop.f32.mrb[0].mxu0
      %v488 = vadd.f32 0.0, %v487
      %v489 = vpop.f32.mrb[0].mxu0
      %490 = vmatprep.mubr.bf16.mxu0 %v403
      %491 = vmatmul.mubr.bf16.gmra.mrb[0].mxu0 %v402
      %v492 = vpop.f32.mrb[0].mxu0
      %v493 = vadd.f32 0.0, %v492
      %v494 = vpop.f32.mrb[0].mxu0
      %v495 = vpop.f32.mrb[0].mxu0
      %v496 = vadd.f32 0.0, %v495
      %v497 = vpop.f32.mrb[0].mxu0
      %498 = vmatprep.mubr.bf16.mxu0 %v405
      %499 = vmatmul.mubr.bf16.gmra.mrb[0].mxu0 %v404
      %v500 = vpop.f32.mrb[0].mxu0
      %v501 = vadd.f32 0.0, %v500
      %v502 = vpop.f32.mrb[0].mxu0
      %v503 = vpop.f32.mrb[0].mxu0
      %v504 = vadd.f32 0.0, %v503
      %v505 = vpop.f32.mrb[0].mxu0
      %506 = vmatprep.mubr.bf16.mxu0 %v407
      %507 = vmatmul.mubr.bf16.gmra.mrb[0].mxu0 %v406
      %v508 = vpop.f32.mrb[0].mxu0
      %v509 = vadd.f32 0.0, %v508
      %v510 = vpop.f32.mrb[0].mxu0
      %v511 = vpop.f32.mrb[0].mxu0
      %v512 = vadd.f32 0.0, %v511
      %v513 = vpop.f32.mrb[0].mxu0
      %514 = vmatprep.mubr.bf16.mxu0 %v409
      %515 = vmatmul.mubr.bf16.gmra.mrb[0].mxu0 %v408
      %v516 = vpop.f32.mrb[0].mxu0
      %v517 = vadd.f32 0.0, %v516
      %v518 = vpop.f32.mrb[0].mxu0
      %v519 = vpop.f32.mrb[0].mxu0
      %v520 = vadd.f32 0.0, %v519
      %v521 = vpop.f32.mrb[0].mxu0
      %522 = vdwg.mxu0
      %v523 = vadd.f32 %v298, %v461
      %v524 = vadd.f32 %v299, %v464
      %v525 = vadd.f32 %v300, %v469
      %v526 = vadd.f32 %v301, %v472
      %v527 = vadd.f32 %v302, %v477
      %v528 = vadd.f32 %v303, %v480
      %v529 = vadd.f32 %v304, %v485
      %v530 = vadd.f32 %v305, %v488
      %v531 = vadd.f32 %v306, %v493
      %v532 = vadd.f32 %v307, %v496
      %v533 = vadd.f32 %v308, %v501
      %v534 = vadd.f32 %v309, %v504
      %v535 = vadd.f32 %v310, %v509
      %v536 = vadd.f32 %v311, %v512
      %v537 = vadd.f32 %v312, %v517
      %v538 = vadd.f32 %v313, %v520
      %539 = vst [vmem:[%s225] sm:$0xff] %v523
      %540 = vst [vmem:[%s225 + $0x8] sm:$0xff] %v524
      %541 = vst [vmem:[%s225 + $0x10] sm:$0xff] %v525
      %542 = vst [vmem:[%s225 + $0x18] sm:$0xff] %v526
      %543 = vst [vmem:[%s225 + $0x20] sm:$0xff] %v527
      %544 = vst [vmem:[%s225 + $0x28] sm:$0xff] %v528
      %545 = vst [vmem:[%s225 + $0x30] sm:$0xff] %v529
      %546 = vst [vmem:[%s225 + $0x38] sm:$0xff] %v530
      %547 = vst [vmem:[%s225 + $0x40] sm:$0xff] %v531
      %548 = vst [vmem:[%s225 + $0x48] sm:$0xff] %v532
      %549 = vst [vmem:[%s225 + $0x50] sm:$0xff] %v533
      %550 = vst [vmem:[%s225 + $0x58] sm:$0xff] %v534
      %551 = vst [vmem:[%s225 + $0x60] sm:$0xff] %v535
      %552 = vst [vmem:[%s225 + $0x68] sm:$0xff] %v536
      %553 = vst [vmem:[%s225 + $0x70] sm:$0xff] %v537
      %554 = vst [vmem:[%s225 + $0x78] sm:$0xff] %v538
      // Predicated region
      $region37: #{lightgcn_forward.5} parent=31 // pred_check
        %p555 = pneg %p228
      $region38: #{lightgcn_forward.5} parent=31 // pred_check_branch
        %557 = sbr.rel (%p555) target = $region40
      $region39: #{lightgcn_forward.5} parent=31 // pred_region
        %v558 = vld [vmem:[%s225] sm:$0xff]
        %v559 = vld [vmem:[%s225 + $0x8] sm:$0xff]
        %v560 = vld [vmem:[%s225 + $0x10] sm:$0xff]
        %v561 = vld [vmem:[%s225 + $0x18] sm:$0xff]
        %v562 = vld [vmem:[%s225 + $0x20] sm:$0xff]
        %v563 = vld [vmem:[%s225 + $0x28] sm:$0xff]
        %v564 = vld [vmem:[%s225 + $0x30] sm:$0xff]
        %v565 = vld [vmem:[%s225 + $0x38] sm:$0xff]
        %v566 = vld [vmem:[%s225 + $0x40] sm:$0xff]
        %v567 = vld [vmem:[%s225 + $0x48] sm:$0xff]
        %v568 = vld [vmem:[%s225 + $0x50] sm:$0xff]
        %v569 = vld [vmem:[%s225 + $0x58] sm:$0xff]
        %v570 = vld [vmem:[%s225 + $0x60] sm:$0xff]
        %v571 = vld [vmem:[%s225 + $0x68] sm:$0xff]
        %v572 = vld [vmem:[%s225 + $0x70] sm:$0xff]
        %v573 = vld [vmem:[%s225 + $0x78] sm:$0xff]
        %v574 = vmul.f32 %v558, 0.25
        %v575 = vmul.f32 %v559, 0.25
        %v576 = vmul.f32 %v560, 0.25
        %v577 = vmul.f32 %v561, 0.25
        %v578 = vmul.f32 %v562, 0.25
        %v579 = vmul.f32 %v563, 0.25
        %v580 = vmul.f32 %v564, 0.25
        %v581 = vmul.f32 %v565, 0.25
        %v582 = vmul.f32 %v566, 0.25
        %v583 = vmul.f32 %v567, 0.25
        %v584 = vmul.f32 %v568, 0.25
        %v585 = vmul.f32 %v569, 0.25
        %v586 = vmul.f32 %v570, 0.25
        %v587 = vmul.f32 %v571, 0.25
        %v588 = vmul.f32 %v572, 0.25
        %v589 = vmul.f32 %v573, 0.25
        %590 = vst [vmem:[%s225] sm:$0xff] %v574
        %591 = vst [vmem:[%s225 + $0x8] sm:$0xff] %v575
        %592 = vst [vmem:[%s225 + $0x10] sm:$0xff] %v576
        %593 = vst [vmem:[%s225 + $0x18] sm:$0xff] %v577
        %594 = vst [vmem:[%s225 + $0x20] sm:$0xff] %v578
        %595 = vst [vmem:[%s225 + $0x28] sm:$0xff] %v579
        %596 = vst [vmem:[%s225 + $0x30] sm:$0xff] %v580
        %597 = vst [vmem:[%s225 + $0x38] sm:$0xff] %v581
        %598 = vst [vmem:[%s225 + $0x40] sm:$0xff] %v582
        %599 = vst [vmem:[%s225 + $0x48] sm:$0xff] %v583
        %600 = vst [vmem:[%s225 + $0x50] sm:$0xff] %v584
        %601 = vst [vmem:[%s225 + $0x58] sm:$0xff] %v585
        %602 = vst [vmem:[%s225 + $0x60] sm:$0xff] %v586
        %603 = vst [vmem:[%s225 + $0x68] sm:$0xff] %v587
        %604 = vst [vmem:[%s225 + $0x70] sm:$0xff] %v588
        %605 = vst [vmem:[%s225 + $0x78] sm:$0xff] %v589
      $region40: #{lightgcn_forward.5} parent=31 // pred_fallthru
        _
      %s606 = smul.u32 16, %s18
      %p607 = scmp.lt.s32.totalorder %s606, 31
      %s608 = scalar_select %p607, %s606, 31
      %s609 = smul.addr %s608, 8
      %s610 = scalar_lea.vmem %s3, %s609
      // Predicated region
      $region41: #{lightgcn_forward.5} parent=31 // pred_check
        %p611 = pneg %p119
      $region42: #{lightgcn_forward.5} parent=31 // pred_check_branch
        %613 = sbr.rel (%p611) target = $region44
      $region43: #{lightgcn_forward.5} parent=31 // pred_region
        %s614 = smul.u32 16, %s18
      $region44: #{lightgcn_forward.5} parent=31 // pred_fallthru
        _
    $region32: #{lightgcn_forward.5} parent=5 // pred_fallthru
      _
    %p615 = scmp.le.s32.totalorder 2, %s9
    // Predicated region
    $region45: #{lightgcn_forward.5} parent=5 // pred_check
      %p616 = pneg %p615
    $region46: #{lightgcn_forward.5} parent=5 // pred_check_branch
      %618 = sbr.rel (%p616) target = $region48
    $region47: #{lightgcn_forward.5} parent=5 // pred_region
      %s619 = ssub.s32 %s9, 2
      // Predicated region
      $region49: #{lightgcn_forward.5} parent=47 // pred_check
        %p620 = pneg %p125
      $region50: #{lightgcn_forward.5} parent=47 // pred_check_branch
        %622 = sbr.rel (%p620) target = $region52
      $region51: #{lightgcn_forward.5} parent=47 // pred_region
        %s623 = smul.u32 16, %s20
        %p624 = scmp.lt.s32.totalorder %s623, 31
        %s625 = scalar_select %p624, %s623, 31
        %s626 = smul.addr %s625, 8
        %s627 = scalar_lea.vmem %s3, %s626
      $region52: #{lightgcn_forward.5} parent=47 // pred_fallthru
        _
    $region48: #{lightgcn_forward.5} parent=5 // pred_fallthru
      _
  $region6: #{lightgcn_forward.5} parent=0 // loop_footer
    %s13 = sadd.s32 1, %s9
  $region7: #{lightgcn_forward.5} parent=0 // loop_footer_branch
    %8 = sbr.rel target = $region3
  $region8: #{lightgcn_forward.5} parent=0 // loop_exit
    _

// kernel: lightgcn_forward.3
$region0: #{lightgcn_forward.3}
  #allocation0 [shape = 'u32[]', space=smem, size = 0x4, offset = 0x4, fixed_abs, tag = 'smem constant byte address 0x4 - core index']
  #allocation1 [shape = 'u32[144,128]{1,0:T(1,128)}', space=vmem, size = 0x12000, scoped, tag = 'internal scratch']
  %s0 = inlined_call_operand.vmem [shape: bf16[256,256], index: 0, kind: input, shape index: {}]
  %s1 = inlined_call_operand.vmem [shape: f32[256,128], index: 1, kind: input, shape index: {}, may-alias: {1,2}]
  %s2 = inlined_call_operand.vmem [shape: f32[256,128], index: 2, kind: input, shape index: {}, may-alias: {1,2}]
  %s3 = inlined_call_operand.vmem [shape: f32[256,128], index: 3, kind: output, shape index: {}]
  %s4 = sld [smem:[#allocation0]]
  $region49: #{lightgcn_forward.3} parent=0
    _
  %s6 = ssub.s32 1, %s4
  %s7 = scalar_select 0, %s6, %s4
  loop: start=0, step=1, limit=4
  $region2: #{lightgcn_forward.3} parent=0 // loop_pre_header
    _
  $region3: #{lightgcn_forward.3} parent=0 // loop_header
    %s9 = sphi 0, %s13
    %p10 = scmp.ge.s32.totalorder %s9, 4
    %s16 = sphi 0, %s28
    %s17 = sphi 0, %s24
    %s18 = sphi 0, %s16
    %s19 = sphi 0, %s17
    %s20 = sphi 0, %s18
    %s21 = sphi 0, %s19
    %s33 = sphi 0, %s35
    %s36 = sphi 0, %s33
    %s37 = sphi 0, %s36
    %s53 = sphi 0, %s37
    %s57 = sphi 0, %s57
    %s59 = sphi 0, %s57
    %s60 = sphi 0, %s59
    %s74 = sphi 0, %s60
    %s80 = sphi 0, %s82
    %s83 = sphi 0, %s80
    %s84 = sphi 0, %s83
    %s100 = sphi 0, %s84
    %s106 = sphi 0, %s108
    %s109 = sphi 0, %s106
    %s110 = sphi 0, %s109
    %s126 = sphi 0, %s110
  $region4: #{lightgcn_forward.3} parent=0 // loop_header_branch
    %12 = sbr.rel (%p10) target = $region8
  $region5: #{lightgcn_forward.3} parent=0 // loop_body
    %s14 = ssub.s32 %s9, 1
    %s15 = ssub.s32 %s9, 2
    %s22 = sadd.s32 1, %s17
    %p23 = scmp.ge.s32.totalorder %s22, 1
    %s24 = scalar_select %p23, 0, %s22
    %s25 = sadd.s32 1, %s16
    %s26 = scalar_select %p23, %s25, %s16
    %p27 = scmp.ge.s32.totalorder %s26, 2
    %s28 = scalar_select %p27, 0, %s26
    %s29 = ssub.s32 %s16, %s28
    %s30 = ssub.s32 %s17, %s24
    %s31 = sor.u32 %s29, %s30
    %p32 = scmp.eq.s32.totalorder %s31, 0
    %s34 = sadd.s32 %s33, 1
    %s35 = scalar_select %p32, %s33, %s34
    %p38 = pneg %p32
    %p39 = scmp.eq.s32.totalorder %s9, 1
    %p40 = por %p38, %p39
    %p41 = scmp.ne.s32.totalorder %s33, %s36
    %p42 = scmp.eq.s32.totalorder %s9, 0
    %p43 = por %p41, %p42
    %p44 = scmp.ne.s32.totalorder %s33, %s36
    %p45 = scmp.eq.s32.totalorder %s14, 1
    %p46 = por %p44, %p45
    %p47 = scmp.ne.s32.totalorder %s36, %s37
    %p48 = scmp.eq.s32.totalorder %s14, 0
    %p49 = por %p47, %p48
    %p50 = scmp.ne.s32.totalorder %s36, %s37
    %p51 = scmp.eq.s32.totalorder %s15, 1
    %p52 = por %p50, %p51
    %p54 = scmp.ne.s32.totalorder %s37, %s53
    %p55 = scmp.eq.s32.totalorder %s15, 0
    %p56 = por %p54, %p55
    %s58 = sadd.s32 %s57, 1
    %p61 = scmp.eq.s32.totalorder %s9, 1
    %p62 = scmp.ne.s32.totalorder %s57, %s59
    %p63 = scmp.eq.s32.totalorder %s9, 0
    %p64 = por %p62, %p63
    %p65 = scmp.ne.s32.totalorder %s57, %s59
    %p66 = scmp.eq.s32.totalorder %s14, 1
    %p67 = por %p65, %p66
    %p68 = scmp.ne.s32.totalorder %s59, %s60
    %p69 = scmp.eq.s32.totalorder %s14, 0
    %p70 = por %p68, %p69
    %p71 = scmp.ne.s32.totalorder %s59, %s60
    %p72 = scmp.eq.s32.totalorder %s15, 1
    %p73 = por %p71, %p72
    %p75 = scmp.ne.s32.totalorder %s60, %s74
    %p76 = scmp.eq.s32.totalorder %s15, 0
    %p77 = por %p75, %p76
    %s78 = ssub.s32 %s16, %s28
    %p79 = scmp.eq.s32.totalorder %s78, 0
    %s81 = sadd.s32 %s80, 1
    %s82 = scalar_select %p79, %s80, %s81
    %p85 = pneg %p79
    %p86 = scmp.eq.s32.totalorder %s9, 1
    %p87 = por %p85, %p86
    %p88 = scmp.ne.s32.totalorder %s80, %s83
    %p89 = scmp.eq.s32.totalorder %s9, 0
    %p90 = por %p88, %p89
    %p91 = scmp.ne.s32.totalorder %s80, %s83
    %p92 = scmp.eq.s32.totalorder %s14, 1
    %p93 = por %p91, %p92
    %p94 = scmp.ne.s32.totalorder %s83, %s84
    %p95 = scmp.eq.s32.totalorder %s14, 0
    %p96 = por %p94, %p95
    %p97 = scmp.ne.s32.totalorder %s83, %s84
    %p98 = scmp.eq.s32.totalorder %s15, 1
    %p99 = por %p97, %p98
    %p101 = scmp.ne.s32.totalorder %s84, %s100
    %p102 = scmp.eq.s32.totalorder %s15, 0
    %p103 = por %p101, %p102
    %s104 = ssub.s32 %s16, %s28
    %p105 = scmp.eq.s32.totalorder %s104, 0
    %s107 = sadd.s32 %s106, 1
    %s108 = scalar_select %p105, %s106, %s107
    %p111 = pneg %p105
    %p112 = scmp.eq.s32.totalorder %s9, 1
    %p113 = por %p111, %p112
    %p114 = scmp.ne.s32.totalorder %s106, %s109
    %p115 = scmp.eq.s32.totalorder %s9, 0
    %p116 = por %p114, %p115
    %p117 = scmp.ne.s32.totalorder %s106, %s109
    %p118 = scmp.eq.s32.totalorder %s14, 1
    %p119 = por %p117, %p118
    %p120 = scmp.ne.s32.totalorder %s109, %s110
    %p121 = scmp.eq.s32.totalorder %s14, 0
    %p122 = por %p120, %p121
    %p123 = scmp.ne.s32.totalorder %s109, %s110
    %p124 = scmp.eq.s32.totalorder %s15, 1
    %p125 = por %p123, %p124
    %p127 = scmp.ne.s32.totalorder %s110, %s126
    %p128 = scmp.eq.s32.totalorder %s15, 0
    %p129 = por %p127, %p128
    %p130 = scmp.le.s32.totalorder 1, %s9
    %p131 = scmp.lt.s32.totalorder %s9, 3
    %p132 = pnand %p130, %p131
    %p133 = pneg %p132
    // Predicated region
    $region9: #{lightgcn_forward.3} parent=5 // pred_check
      _
    $region10: #{lightgcn_forward.3} parent=5 // pred_check_branch
      %135 = sbr.rel (%p132) target = $region12
    $region11: #{lightgcn_forward.3} parent=5 // pred_region
      %s136 = ssub.s32 %s9, 1
      // Predicated region
      $region13: #{lightgcn_forward.3} parent=11 // pred_check
        %p137 = pneg %p70
      $region14: #{lightgcn_forward.3} parent=11 // pred_check_branch
        %139 = sbr.rel (%p137) target = $region16
      $region15: #{lightgcn_forward.3} parent=11 // pred_region
        _
      $region16: #{lightgcn_forward.3} parent=11 // pred_fallthru
        _
    $region12: #{lightgcn_forward.3} parent=5 // pred_fallthru
      _
    %p140 = scmp.lt.s32.totalorder %s9, 2
    // Predicated region
    $region17: #{lightgcn_forward.3} parent=5 // pred_check
      %p141 = pneg %p140
    $region18: #{lightgcn_forward.3} parent=5 // pred_check_branch
      %143 = sbr.rel (%p141) target = $region20
    $region19: #{lightgcn_forward.3} parent=5 // pred_region
      // Predicated region
      $region21: #{lightgcn_forward.3} parent=19 // pred_check
        %p144 = pneg %p43
      $region22: #{lightgcn_forward.3} parent=19 // pred_check_branch
        %146 = sbr.rel (%p144) target = $region24
      $region23: #{lightgcn_forward.3} parent=19 // pred_region
        %s147 = smul.u32 16, %s16
        %s148 = smul.u32 2, %s17
        %p149 = scmp.lt.s32.totalorder %s147, 31
        %s150 = scalar_select %p149, %s147, 31
        %p151 = scmp.lt.s32.totalorder %s148, 1
        %s152 = scalar_select %p151, %s148, 1
        %s153 = smul.addr %s150, 2
        %s154 = sadd.s32 %s152, %s153
        %s155 = smul.addr %s154, 4
        %s156 = scalar_lea.vmem %s0, %s155
        %s157 = smul.u32 16, %s16
        %s158 = smul.u32 2, %s17
      $region24: #{lightgcn_forward.3} parent=19 // pred_fallthru
        _
      // Predicated region
      $region25: #{lightgcn_forward.3} parent=19 // pred_check
        %p159 = pneg %p90
      $region26: #{lightgcn_forward.3} parent=19 // pred_check_branch
        %161 = sbr.rel (%p159) target = $region28
      $region27: #{lightgcn_forward.3} parent=19 // pred_region
        %s162 = smul.u32 16, %s16
        %p163 = scmp.lt.s32.totalorder %s162, 31
        %s164 = scalar_select %p163, %s162, 31
        %s165 = smul.addr %s164, 8
        %s166 = scalar_lea.vmem %s2, %s165
        %s167 = smul.u32 16, %s16
      $region28: #{lightgcn_forward.3} parent=19 // pred_fallthru
        _
    $region20: #{lightgcn_forward.3} parent=5 // pred_fallthru
      _
    %p168 = scmp.le.s32.totalorder 1, %s9
    %p169 = scmp.lt.s32.totalorder %s9, 3
    %p170 = pnand %p168, %p169
    %p171 = pneg %p170
    // Predicated region
    $region29: #{lightgcn_forward.3} parent=5 // pred_check
      _
    $region30: #{lightgcn_forward.3} parent=5 // pred_check_branch
      %173 = sbr.rel (%p170) target = $region32
    $region31: #{lightgcn_forward.3} parent=5 // pred_region
      %s174 = ssub.s32 %s9, 1
      %s175 = smul.u32 16, %s18
      %s176 = smul.u32 2, %s19
      %p177 = scmp.lt.s32.totalorder %s175, 31
      %s178 = scalar_select %p177, %s175, 31
      %p179 = scmp.lt.s32.totalorder %s176, 1
      %s180 = scalar_select %p179, %s176, 1
      %s181 = smul.addr %s178, 2
      %s182 = sadd.s32 %s180, %s181
      %s183 = smul.addr %s182, 4
      %s184 = scalar_lea.vmem %s0, %s183
      %p185 = pneg %p49
      %p186 = pneg %p46
      %p187 = pneg %p70
      %p188 = pneg %p67
      %s189 = smul.u32 16, %s18
      %p190 = scmp.lt.s32.totalorder %s189, 31
      %s191 = scalar_select %p190, %s189, 31
      %s192 = smul.addr %s191, 8
      %s193 = scalar_lea.vmem %s2, %s192
      %p194 = pneg %p96
      %p195 = pneg %p93
      %p196 = pneg %p122
      %p197 = pneg %p119
      %s198 = smul.u32 16, %s18
      %p199 = scmp.lt.s32.totalorder %s198, 31
      %s200 = scalar_select %p199, %s198, 31
      %s201 = smul.addr %s200, 8
      %s202 = scalar_lea.vmem %s3, %s201
      %s203 = smul.u32 16, %s18
      %s204 = smul.u32 2, %s19
      %p205 = scmp.lt.s32.totalorder %s203, 31
      %s206 = scalar_select %p205, %s203, 31
      %p207 = scmp.lt.s32.totalorder %s204, 1
      %s208 = scalar_select %p207, %s204, 1
      %s209 = smul.addr %s206, 2
      %s210 = sadd.s32 %s208, %s209
      %s211 = smul.addr %s210, 4
      %s212 = scalar_lea.vmem %s0, %s211
      %s213 = smul.u32 16, %s18
      %s214 = smul.u32 2, %s19
      %s215 = smul.u32 16, %s18
      %p216 = scmp.lt.s32.totalorder %s215, 31
      %s217 = scalar_select %p216, %s215, 31
      %s218 = smul.addr %s217, 8
      %s219 = scalar_lea.vmem %s2, %s218
      %s220 = smul.u32 16, %s18
      %s221 = smul.u32 16, %s18
      %p222 = scmp.lt.s32.totalorder %s221, 31
      %s223 = scalar_select %p222, %s221, 31
      %s224 = smul.addr %s223, 8
      %s225 = scalar_lea.vmem %s3, %s224
      %s226 = smul.u32 16, %s18
      %p228 = scmp.eq.s32.totalorder %s19, 0
      // Predicated region
      $region33: #{lightgcn_forward.3} parent=31 // pred_check
        %p229 = pneg %p228
      $region34: #{lightgcn_forward.3} parent=31 // pred_check_branch
        %231 = sbr.rel (%p229) target = $region36
      $region35: #{lightgcn_forward.3} parent=31 // pred_region
        %v232 = vld [vmem:[%s219] sm:$0xff]
        %v233 = vld [vmem:[%s219 + $0x8] sm:$0xff]
        %v234 = vld [vmem:[%s219 + $0x10] sm:$0xff]
        %v235 = vld [vmem:[%s219 + $0x18] sm:$0xff]
        %v236 = vld [vmem:[%s219 + $0x20] sm:$0xff]
        %v237 = vld [vmem:[%s219 + $0x28] sm:$0xff]
        %v238 = vld [vmem:[%s219 + $0x30] sm:$0xff]
        %v239 = vld [vmem:[%s219 + $0x38] sm:$0xff]
        %v240 = vld [vmem:[%s219 + $0x40] sm:$0xff]
        %v241 = vld [vmem:[%s219 + $0x48] sm:$0xff]
        %v242 = vld [vmem:[%s219 + $0x50] sm:$0xff]
        %v243 = vld [vmem:[%s219 + $0x58] sm:$0xff]
        %v244 = vld [vmem:[%s219 + $0x60] sm:$0xff]
        %v245 = vld [vmem:[%s219 + $0x68] sm:$0xff]
        %v246 = vld [vmem:[%s219 + $0x70] sm:$0xff]
        %v247 = vld [vmem:[%s219 + $0x78] sm:$0xff]
        %248 = vst [vmem:[%s225] sm:$0xff] %v232
        %249 = vst [vmem:[%s225 + $0x8] sm:$0xff] %v233
        %250 = vst [vmem:[%s225 + $0x10] sm:$0xff] %v234
        %251 = vst [vmem:[%s225 + $0x18] sm:$0xff] %v235
        %252 = vst [vmem:[%s225 + $0x20] sm:$0xff] %v236
        %253 = vst [vmem:[%s225 + $0x28] sm:$0xff] %v237
        %254 = vst [vmem:[%s225 + $0x30] sm:$0xff] %v238
        %255 = vst [vmem:[%s225 + $0x38] sm:$0xff] %v239
        %256 = vst [vmem:[%s225 + $0x40] sm:$0xff] %v240
        %257 = vst [vmem:[%s225 + $0x48] sm:$0xff] %v241
        %258 = vst [vmem:[%s225 + $0x50] sm:$0xff] %v242
        %259 = vst [vmem:[%s225 + $0x58] sm:$0xff] %v243
        %260 = vst [vmem:[%s225 + $0x60] sm:$0xff] %v244
        %261 = vst [vmem:[%s225 + $0x68] sm:$0xff] %v245
        %262 = vst [vmem:[%s225 + $0x70] sm:$0xff] %v246
        %263 = vst [vmem:[%s225 + $0x78] sm:$0xff] %v247
      $region36: #{lightgcn_forward.3} parent=31 // pred_fallthru
        _
      %s264 = smul.u32 %s19, 256
      %s265 = scalar_lea.vmem %s1, %s264
      %v266 = vld [vmem:[%s265] sm:$0xff]
      %v267 = vld [vmem:[%s265 + $0x8] sm:$0xff]
      %v268 = vld [vmem:[%s265 + $0x10] sm:$0xff]
      %v269 = vld [vmem:[%s265 + $0x18] sm:$0xff]
      %v270 = vld [vmem:[%s265 + $0x20] sm:$0xff]
      %v271 = vld [vmem:[%s265 + $0x28] sm:$0xff]
      %v272 = vld [vmem:[%s265 + $0x30] sm:$0xff]
      %v273 = vld [vmem:[%s265 + $0x38] sm:$0xff]
      %v274 = vld [vmem:[%s265 + $0x40] sm:$0xff]
      %v275 = vld [vmem:[%s265 + $0x48] sm:$0xff]
      %v276 = vld [vmem:[%s265 + $0x50] sm:$0xff]
      %v277 = vld [vmem:[%s265 + $0x58] sm:$0xff]
      %v278 = vld [vmem:[%s265 + $0x60] sm:$0xff]
      %v279 = vld [vmem:[%s265 + $0x68] sm:$0xff]
      %v280 = vld [vmem:[%s265 + $0x70] sm:$0xff]
      %v281 = vld [vmem:[%s265 + $0x78] sm:$0xff]
      %v282 = vld [vmem:[%s265 + $0x80] sm:$0xff]
      %v283 = vld [vmem:[%s265 + $0x88] sm:$0xff]
      %v284 = vld [vmem:[%s265 + $0x90] sm:$0xff]
      %v285 = vld [vmem:[%s265 + $0x98] sm:$0xff]
      %v286 = vld [vmem:[%s265 + $0xa0] sm:$0xff]
      %v287 = vld [vmem:[%s265 + $0xa8] sm:$0xff]
      %v288 = vld [vmem:[%s265 + $0xb0] sm:$0xff]
      %v289 = vld [vmem:[%s265 + $0xb8] sm:$0xff]
      %v290 = vld [vmem:[%s265 + $0xc0] sm:$0xff]
      %v291 = vld [vmem:[%s265 + $0xc8] sm:$0xff]
      %v292 = vld [vmem:[%s265 + $0xd0] sm:$0xff]
      %v293 = vld [vmem:[%s265 + $0xd8] sm:$0xff]
      %v294 = vld [vmem:[%s265 + $0xe0] sm:$0xff]
      %v295 = vld [vmem:[%s265 + $0xe8] sm:$0xff]
      %v296 = vld [vmem:[%s265 + $0xf0] sm:$0xff]
      %v297 = vld [vmem:[%s265 + $0xf8] sm:$0xff]
      %v298 = vld [vmem:[%s225] sm:$0xff]
      %v299 = vld [vmem:[%s225 + $0x8] sm:$0xff]
      %v300 = vld [vmem:[%s225 + $0x10] sm:$0xff]
      %v301 = vld [vmem:[%s225 + $0x18] sm:$0xff]
      %v302 = vld [vmem:[%s225 + $0x20] sm:$0xff]
      %v303 = vld [vmem:[%s225 + $0x28] sm:$0xff]
      %v304 = vld [vmem:[%s225 + $0x30] sm:$0xff]
      %v305 = vld [vmem:[%s225 + $0x38] sm:$0xff]
      %v306 = vld [vmem:[%s225 + $0x40] sm:$0xff]
      %v307 = vld [vmem:[%s225 + $0x48] sm:$0xff]
      %v308 = vld [vmem:[%s225 + $0x50] sm:$0xff]
      %v309 = vld [vmem:[%s225 + $0x58] sm:$0xff]
      %v310 = vld [vmem:[%s225 + $0x60] sm:$0xff]
      %v311 = vld [vmem:[%s225 + $0x68] sm:$0xff]
      %v312 = vld [vmem:[%s225 + $0x70] sm:$0xff]
      %v313 = vld [vmem:[%s225 + $0x78] sm:$0xff]
      %v314 = vld [vmem:[%s212] sm:$0xff]
      %v315 = vld [vmem:[%s212 + $0x8] sm:$0xff]
      %v316 = vld [vmem:[%s212 + $0x10] sm:$0xff]
      %v317 = vld [vmem:[%s212 + $0x18] sm:$0xff]
      %v318 = vld [vmem:[%s212 + $0x20] sm:$0xff]
      %v319 = vld [vmem:[%s212 + $0x28] sm:$0xff]
      %v320 = vld [vmem:[%s212 + $0x30] sm:$0xff]
      %v321 = vld [vmem:[%s212 + $0x38] sm:$0xff]
      %v322 = vld [vmem:[%s212 + $0x40] sm:$0xff]
      %v323 = vld [vmem:[%s212 + $0x48] sm:$0xff]
      %v324 = vld [vmem:[%s212 + $0x50] sm:$0xff]
      %v325 = vld [vmem:[%s212 + $0x58] sm:$0xff]
      %v326 = vld [vmem:[%s212 + $0x60] sm:$0xff]
      %v327 = vld [vmem:[%s212 + $0x68] sm:$0xff]
      %v328 = vld [vmem:[%s212 + $0x70] sm:$0xff]
      %v329 = vld [vmem:[%s212 + $0x78] sm:$0xff]
      %v330 = vpack.c.bf16 %v267, %v266
      %v331 = vpack.c.bf16 %v269, %v268
      %v332 = vpack.c.bf16 %v271, %v270
      %v333 = vpack.c.bf16 %v273, %v272
      %v334 = vpack.c.bf16 %v275, %v274
      %v335 = vpack.c.bf16 %v277, %v276
      %v336 = vpack.c.bf16 %v279, %v278
      %v337 = vpack.c.bf16 %v281, %v280
      %v338 = vpack.c.bf16 %v283, %v282
      %v339 = vpack.c.bf16 %v285, %v284
      %v340 = vpack.c.bf16 %v287, %v286
      %v341 = vpack.c.bf16 %v289, %v288
      %v342 = vpack.c.bf16 %v291, %v290
      %v343 = vpack.c.bf16 %v293, %v292
      %v344 = vpack.c.bf16 %v295, %v294
      %v345 = vpack.c.bf16 %v297, %v296
      %v362 = vunpack.c.l.b16 %v314
      %v363 = vunpack.c.h.b16 %v314
      %v364 = vunpack.c.l.b16 %v315
      %v365 = vunpack.c.h.b16 %v315
      %v366 = vunpack.c.l.b16 %v316
      %v367 = vunpack.c.h.b16 %v316
      %v368 = vunpack.c.l.b16 %v317
      %v369 = vunpack.c.h.b16 %v317
      %v370 = vunpack.c.l.b16 %v318
      %v371 = vunpack.c.h.b16 %v318
      %v372 = vunpack.c.l.b16 %v319
      %v373 = vunpack.c.h.b16 %v319
      %v374 = vunpack.c.l.b16 %v320
      %v375 = vunpack.c.h.b16 %v320
      %v376 = vunpack.c.l.b16 %v321
      %v377 = vunpack.c.h.b16 %v321
      %v378 = vunpack.c.l.b16 %v322
      %v379 = vunpack.c.h.b16 %v322
      %v380 = vunpack.c.l.b16 %v323
      %v381 = vunpack.c.h.b16 %v323
      %v382 = vunpack.c.l.b16 %v324
      %v383 = vunpack.c.h.b16 %v324
      %v384 = vunpack.c.l.b16 %v325
      %v385 = vunpack.c.h.b16 %v325
      %v386 = vunpack.c.l.b16 %v326
      %v387 = vunpack.c.h.b16 %v326
      %v388 = vunpack.c.l.b16 %v327
      %v389 = vunpack.c.h.b16 %v327
      %v390 = vunpack.c.l.b16 %v328
      %v391 = vunpack.c.h.b16 %v328
      %v392 = vunpack.c.l.b16 %v329
      %v393 = vunpack.c.h.b16 %v329
      %v394 = vpack.c.b16 %v364, %v362
      %v395 = vpack.c.b16 %v365, %v363
      %v396 = vpack.c.b16 %v368, %v366
      %v397 = vpack.c.b16 %v369, %v367
      %v398 = vpack.c.b16 %v372, %v370
      %v399 = vpack.c.b16 %v373, %v371
      %v400 = vpack.c.b16 %v376, %v374
      %v401 = vpack.c.b16 %v377, %v375
      %v402 = vpack.c.b16 %v380, %v378
      %v403 = vpack.c.b16 %v381, %v379
      %v404 = vpack.c.b16 %v384, %v382
      %v405 = vpack.c.b16 %v385, %v383
      %v406 = vpack.c.b16 %v388, %v386
      %v407 = vpack.c.b16 %v389, %v387
      %v408 = vpack.c.b16 %v392, %v390
      %v409 = vpack.c.b16 %v393, %v391
      %426 = vmatprep.subr.bf16.mxu0 0
      %427 = vmatpush1.bf16.msra.mxu0 %v330
      %428 = vmatprep.subr.bf16.mxu0 0
      %429 = vmatpush1.bf16.msra.mxu0 %v331
      %430 = vmatprep.subr.bf16.mxu0 0
      %431 = vmatpush1.bf16.msra.mxu0 %v332
      %432 = vmatprep.subr.bf16.mxu0 0
      %433 = vmatpush1.bf16.msra.mxu0 %v333
      %434 = vmatprep.subr.bf16.mxu0 0
      %435 = vmatpush1.bf16.msra.mxu0 %v334
      %436 = vmatprep.subr.bf16.mxu0 0
      %437 = vmatpush1.bf16.msra.mxu0 %v335
      %438 = vmatprep.subr.bf16.mxu0 0
      %439 = vmatpush1.bf16.msra.mxu0 %v336
      %440 = vmatprep.subr.bf16.mxu0 0
      %441 = vmatpush1.bf16.msra.mxu0 %v337
      %442 = vmatprep.subr.bf16.mxu0 0
      %443 = vmatpush1.bf16.msra.mxu0 %v338
      %444 = vmatprep.subr.bf16.mxu0 0
      %445 = vmatpush1.bf16.msra.mxu0 %v339
      %446 = vmatprep.subr.bf16.mxu0 0
      %447 = vmatpush1.bf16.msra.mxu0 %v340
      %448 = vmatprep.subr.bf16.mxu0 0
      %449 = vmatpush1.bf16.msra.mxu0 %v341
      %450 = vmatprep.subr.bf16.mxu0 0
      %451 = vmatpush1.bf16.msra.mxu0 %v342
      %452 = vmatprep.subr.bf16.mxu0 0
      %453 = vmatpush1.bf16.msra.mxu0 %v343
      %454 = vmatprep.subr.bf16.mxu0 0
      %455 = vmatpush1.bf16.msra.mxu0 %v344
      %456 = vmatprep.subr.bf16.mxu0 0
      %457 = vmatpush1.bf16.msra.mxu0 %v345
      %458 = vmatprep.mubr.bf16.mxu0 %v395
      %459 = vmatmul.mubr.bf16.gmra.mrb[0].mxu0 %v394
      %v460 = vpop.f32.mrb[0].mxu0
      %v461 = vadd.f32 0.0, %v460
      %v462 = vpop.f32.mrb[0].mxu0
      %v463 = vpop.f32.mrb[0].mxu0
      %v464 = vadd.f32 0.0, %v463
      %v465 = vpop.f32.mrb[0].mxu0
      %466 = vmatprep.mubr.bf16.mxu0 %v397
      %467 = vmatmul.mubr.bf16.gmra.mrb[0].mxu0 %v396
      %v468 = vpop.f32.mrb[0].mxu0
      %v469 = vadd.f32 0.0, %v468
      %v470 = vpop.f32.mrb[0].mxu0
      %v471 = vpop.f32.mrb[0].mxu0
      %v472 = vadd.f32 0.0, %v471
      %v473 = vpop.f32.mrb[0].mxu0
      %474 = vmatprep.mubr.bf16.mxu0 %v399
      %475 = vmatmul.mubr.bf16.gmra.mrb[0].mxu0 %v398
      %v476 = vpop.f32.mrb[0].mxu0
      %v477 = vadd.f32 0.0, %v476
      %v478 = vpop.f32.mrb[0].mxu0
      %v479 = vpop.f32.mrb[0].mxu0
      %v480 = vadd.f32 0.0, %v479
      %v481 = vpop.f32.mrb[0].mxu0
      %482 = vmatprep.mubr.bf16.mxu0 %v401
      %483 = vmatmul.mubr.bf16.gmra.mrb[0].mxu0 %v400
      %v484 = vpop.f32.mrb[0].mxu0
      %v485 = vadd.f32 0.0, %v484
      %v486 = vpop.f32.mrb[0].mxu0
      %v487 = vpop.f32.mrb[0].mxu0
      %v488 = vadd.f32 0.0, %v487
      %v489 = vpop.f32.mrb[0].mxu0
      %490 = vmatprep.mubr.bf16.mxu0 %v403
      %491 = vmatmul.mubr.bf16.gmra.mrb[0].mxu0 %v402
      %v492 = vpop.f32.mrb[0].mxu0
      %v493 = vadd.f32 0.0, %v492
      %v494 = vpop.f32.mrb[0].mxu0
      %v495 = vpop.f32.mrb[0].mxu0
      %v496 = vadd.f32 0.0, %v495
      %v497 = vpop.f32.mrb[0].mxu0
      %498 = vmatprep.mubr.bf16.mxu0 %v405
      %499 = vmatmul.mubr.bf16.gmra.mrb[0].mxu0 %v404
      %v500 = vpop.f32.mrb[0].mxu0
      %v501 = vadd.f32 0.0, %v500
      %v502 = vpop.f32.mrb[0].mxu0
      %v503 = vpop.f32.mrb[0].mxu0
      %v504 = vadd.f32 0.0, %v503
      %v505 = vpop.f32.mrb[0].mxu0
      %506 = vmatprep.mubr.bf16.mxu0 %v407
      %507 = vmatmul.mubr.bf16.gmra.mrb[0].mxu0 %v406
      %v508 = vpop.f32.mrb[0].mxu0
      %v509 = vadd.f32 0.0, %v508
      %v510 = vpop.f32.mrb[0].mxu0
      %v511 = vpop.f32.mrb[0].mxu0
      %v512 = vadd.f32 0.0, %v511
      %v513 = vpop.f32.mrb[0].mxu0
      %514 = vmatprep.mubr.bf16.mxu0 %v409
      %515 = vmatmul.mubr.bf16.gmra.mrb[0].mxu0 %v408
      %v516 = vpop.f32.mrb[0].mxu0
      %v517 = vadd.f32 0.0, %v516
      %v518 = vpop.f32.mrb[0].mxu0
      %v519 = vpop.f32.mrb[0].mxu0
      %v520 = vadd.f32 0.0, %v519
      %v521 = vpop.f32.mrb[0].mxu0
      %522 = vdwg.mxu0
      %v523 = vadd.f32 %v298, %v461
      %v524 = vadd.f32 %v299, %v464
      %v525 = vadd.f32 %v300, %v469
      %v526 = vadd.f32 %v301, %v472
      %v527 = vadd.f32 %v302, %v477
      %v528 = vadd.f32 %v303, %v480
      %v529 = vadd.f32 %v304, %v485
      %v530 = vadd.f32 %v305, %v488
      %v531 = vadd.f32 %v306, %v493
      %v532 = vadd.f32 %v307, %v496
      %v533 = vadd.f32 %v308, %v501
      %v534 = vadd.f32 %v309, %v504
      %v535 = vadd.f32 %v310, %v509
      %v536 = vadd.f32 %v311, %v512
      %v537 = vadd.f32 %v312, %v517
      %v538 = vadd.f32 %v313, %v520
      %539 = vst [vmem:[%s225] sm:$0xff] %v523
      %540 = vst [vmem:[%s225 + $0x8] sm:$0xff] %v524
      %541 = vst [vmem:[%s225 + $0x10] sm:$0xff] %v525
      %542 = vst [vmem:[%s225 + $0x18] sm:$0xff] %v526
      %543 = vst [vmem:[%s225 + $0x20] sm:$0xff] %v527
      %544 = vst [vmem:[%s225 + $0x28] sm:$0xff] %v528
      %545 = vst [vmem:[%s225 + $0x30] sm:$0xff] %v529
      %546 = vst [vmem:[%s225 + $0x38] sm:$0xff] %v530
      %547 = vst [vmem:[%s225 + $0x40] sm:$0xff] %v531
      %548 = vst [vmem:[%s225 + $0x48] sm:$0xff] %v532
      %549 = vst [vmem:[%s225 + $0x50] sm:$0xff] %v533
      %550 = vst [vmem:[%s225 + $0x58] sm:$0xff] %v534
      %551 = vst [vmem:[%s225 + $0x60] sm:$0xff] %v535
      %552 = vst [vmem:[%s225 + $0x68] sm:$0xff] %v536
      %553 = vst [vmem:[%s225 + $0x70] sm:$0xff] %v537
      %554 = vst [vmem:[%s225 + $0x78] sm:$0xff] %v538
      %s555 = smul.u32 16, %s18
      %p556 = scmp.lt.s32.totalorder %s555, 31
      %s557 = scalar_select %p556, %s555, 31
      %s558 = smul.addr %s557, 8
      %s559 = scalar_lea.vmem %s3, %s558
      // Predicated region
      $region37: #{lightgcn_forward.3} parent=31 // pred_check
        %p560 = pneg %p119
      $region38: #{lightgcn_forward.3} parent=31 // pred_check_branch
        %562 = sbr.rel (%p560) target = $region40
      $region39: #{lightgcn_forward.3} parent=31 // pred_region
        %s563 = smul.u32 16, %s18
      $region40: #{lightgcn_forward.3} parent=31 // pred_fallthru
        _
    $region32: #{lightgcn_forward.3} parent=5 // pred_fallthru
      _
    %p564 = scmp.le.s32.totalorder 2, %s9
    // Predicated region
    $region41: #{lightgcn_forward.3} parent=5 // pred_check
      %p565 = pneg %p564
    $region42: #{lightgcn_forward.3} parent=5 // pred_check_branch
      %567 = sbr.rel (%p565) target = $region44
    $region43: #{lightgcn_forward.3} parent=5 // pred_region
      %s568 = ssub.s32 %s9, 2
      // Predicated region
      $region45: #{lightgcn_forward.3} parent=43 // pred_check
        %p569 = pneg %p125
      $region46: #{lightgcn_forward.3} parent=43 // pred_check_branch
        %571 = sbr.rel (%p569) target = $region48
      $region47: #{lightgcn_forward.3} parent=43 // pred_region
        %s572 = smul.u32 16, %s20
        %p573 = scmp.lt.s32.totalorder %s572, 31
        %s574 = scalar_select %p573, %s572, 31
        %s575 = smul.addr %s574, 8
        %s576 = scalar_lea.vmem %s3, %s575
      $region48: #{lightgcn_forward.3} parent=43 // pred_fallthru
        _
    $region44: #{lightgcn_forward.3} parent=5 // pred_fallthru
      _
  $region6: #{lightgcn_forward.3} parent=0 // loop_footer
    %s13 = sadd.s32 1, %s9
  $region7: #{lightgcn_forward.3} parent=0 // loop_footer_branch
    %8 = sbr.rel target = $region3
  $region8: #{lightgcn_forward.3} parent=0 // loop_exit
    _

</llo_original>
